<compile_context>
chip_gen: v7x
topology: tpu7x:2x2x1
jax: 0.10.0
libtpu: 0.0.40
codegen_flags: <defaults>
</compile_context>

<pallas_src>
import jax
import jax.numpy as jnp
from jax import lax
from jax.experimental import pallas as pl
from jax.experimental.pallas import tpu as pltpu


# ---------------------------------------------------------------------------
# Kernel
# ---------------------------------------------------------------------------
def ensemble_kernel(x_ref,             # (TB, in_dim)  f32   batch tile
                    w0_ref, b0_ref,    # (in_dim, L) bf16, (1, L) f32
                    w1_ref, b1_ref,    # (L, L)      bf16, (1, L) f32
                    wgt_ref, bgt_ref,  # (2, L)      bf16, (2, 1) f32  (fused last-linear+Gaussian, transposed)
                    out_ref):          # (2, TB)     f32   row0 = mu, row1 = softplus(sig)+1e-6
    x = x_ref[...].astype(jnp.bfloat16)

    # Linear(in_dim -> L) + ReLU   (bf16 MXU operands, f32 accumulate / elementwise)
    h = jnp.dot(x, w0_ref[...], preferred_element_type=jnp.float32) + b0_ref[...]
    h = jnp.maximum(h, 0.0)

    # Linear(L -> L) + ReLU
    h = jnp.dot(h.astype(jnp.bfloat16), w1_ref[...],
                preferred_element_type=jnp.float32) + b1_ref[...]
    h = jnp.maximum(h, 0.0)

    # Fused [Linear(L->30); GaussianLayer(30->1)x2] as one (2, L) projection, computed
    # directly in transposed (2, TB) form: yt[c, b] = sum_l wgt[c, l] * h[b, l] + bgt[c].
    yt = jnp.einsum("cl,bl->cb", wgt_ref[...], h.astype(jnp.bfloat16),
                    preferred_element_type=jnp.float32) + bgt_ref[...]      # (2, TB)

    # Stable softplus + 1e-6 applied only to row 1 (sigma); row 0 (mu) passes through.
    soft = jnp.maximum(yt, 0.0) + jnp.log(1.0 + jnp.exp(-jnp.abs(yt))) + 1e-6
    row = lax.broadcasted_iota(jnp.int32, yt.shape, 0)
    out_ref[...] = jnp.where(row == 1, soft, yt)                             # one dense store


# ---------------------------------------------------------------------------
# Parameter construction / preparation
# ---------------------------------------------------------------------------
def init_params(key, n_tokens=4, latent_dim=128, seq_len=80):
    """Deterministic synthetic parameters (shapes follow the PyTorch module __init__)."""
    in_dim = n_tokens * seq_len
    keys = jax.random.split(key, 10)
    w0 = jax.random.normal(keys[0], (in_dim, latent_dim), jnp.float32) * 0.05
    b0 = jax.random.normal(keys[1], (1, latent_dim), jnp.float32) * 0.05
    w1 = jax.random.normal(keys[2], (latent_dim, latent_dim), jnp.float32) * 0.05
    b1 = jax.random.normal(keys[3], (1, latent_dim), jnp.float32) * 0.05
    w2 = jax.random.normal(keys[4], (latent_dim, 30), jnp.float32) * 0.05
    b2 = jax.random.normal(keys[5], (1, 30), jnp.float32) * 0.05
    # GaussianLayer params: standard-normal init as in .normal_()
    gw1 = jax.random.normal(keys[6], (30, 1), jnp.float32)
    gb1 = jax.random.normal(keys[7], (1, 1), jnp.float32)
    gw2 = jax.random.normal(keys[8], (30, 1), jnp.float32)
    gb2 = jax.random.normal(keys[9], (1, 1), jnp.float32)
    return (w0, b0, w1, b1, w2, b2, gw1, gb1, gw2, gb2)


def prepare_params(raw_params):
    """Algebraic fusion of Linear(L->30) with GaussianLayer (exact — no nonlinearity between
    them), transposed to (2, L) for lane-dense output, plus bf16 cast of matmul weights."""
    w0, b0, w1, b1, w2, b2, gw1, gb1, gw2, gb2 = raw_params
    g_w = jnp.concatenate([gw1, gw2], axis=1)                 # (30, 2)
    g_b = jnp.concatenate([gb1, gb2], axis=1)                 # (1, 2)
    wg = w2 @ g_w                                             # (L, 2)  f32
    bg = b2 @ g_w + g_b                                       # (1, 2)  f32
    wg_t = wg.T                                               # (2, L)
    bg_t = bg.T                                               # (2, 1)
    return (w0.astype(jnp.bfloat16), b0.astype(jnp.float32),
            w1.astype(jnp.bfloat16), b1.astype(jnp.float32),
            wg_t.astype(jnp.bfloat16), bg_t.astype(jnp.float32))


# ---------------------------------------------------------------------------
# Forward (Pallas)
# ---------------------------------------------------------------------------
def _round_up(n, m):
    return ((n + m - 1) // m) * m


def ensemble_forward(x, fused_params, *, tb_cap=4096):
    """x: (batch, n_tokens, seq_len) -> [mu (batch, 1), sigma (batch, 1)]."""
    w0, b0, w1, b1, wg_t, bg_t = fused_params
    in_dim, latent = w0.shape
    B = x.shape[0]

    x_flat = x.reshape(B, -1).astype(jnp.float32)             # nn.Flatten()
    assert x_flat.shape[1] == in_dim

    # Batch tile: multiple of 128 (lane-dense (2, tb) output blocks), sized so large batches
    # get >= 2 grid steps (v7x dual TensorCores on the "parallel" axis), capped at tb_cap
    # (x double-buffer 2*tb*in_dim*4B ~= 10.5 MiB at tb=4096 — fits every generation's VMEM).
    tb = max(128, min(tb_cap, _round_up(pl.cdiv(B, 2), 128)))

    # No wrapper-side pad for large batches: the ragged boundary tile is read with don't-care
    # rows (all ops are row-wise; over-allocated output rows are sliced off below).
    # Only pad when the whole batch is smaller than one tile (tiny copy).
    if B < tb:
        x_flat = jnp.pad(x_flat, ((0, tb - B), (0, 0)))

    grid_b = pl.cdiv(max(B, tb), tb)
    b_out = grid_b * tb                                        # dense output allocation

    out = pl.pallas_call(
        ensemble_kernel,
        out_shape=jax.ShapeDtypeStruct((2, b_out), jnp.float32),
        grid=(grid_b,),
        in_specs=[
            pl.BlockSpec((tb, in_dim), lambda i: (i, 0)),       # x: batch-tiled, pipelined
            pl.BlockSpec((in_dim, latent), lambda i: (0, 0)),   # weights/biases: VMEM-resident
            pl.BlockSpec((1, latent), lambda i: (0, 0)),
            pl.BlockSpec((latent, latent), lambda i: (0, 0)),
            pl.BlockSpec((1, latent), lambda i: (0, 0)),
            pl.BlockSpec((2, latent), lambda i: (0, 0)),
            pl.BlockSpec((2, 1), lambda i: (0, 0)),
        ],
        out_specs=pl.BlockSpec((2, tb), lambda i: (0, i)),      # lane-dense [mu; sigma] rows
        compiler_params=pltpu.CompilerParams(
            dimension_semantics=("parallel",),
            vmem_limit_bytes=40 * 1024 * 1024),
    )(x_flat, w0, b0, w1, b1, wg_t, bg_t)

    mu = out[0, :B].reshape(B, 1)
    sig = out[1, :B].reshape(B, 1)
    return [mu, sig]


# ---------------------------------------------------------------------------
# References
# ---------------------------------------------------------------------------
def ensemble_forward_ref_f32(x, raw_params):
    """Pure-f32 JAX reference, literal translation of the PyTorch module."""
    w0, b0, w1, b1, w2, b2, gw1, gb1, gw2, gb2 = raw_params
    B = x.shape[0]
    h = x.reshape(B, -1).astype(jnp.float32)
    h = jnp.maximum(h @ w0 + b0, 0.0)
    h = jnp.maximum(h @ w1 + b1, 0.0)
    h = h @ w2 + b2
    mu = h @ gw1 + gb1
    sig = jnp.log(1.0 + jnp.exp(h @ gw2 + gb2)) + 1e-6
    return [mu, sig]


def ensemble_forward_ref_fused(x, fused_params):
    """JAX reference mirroring the kernel's fused-bf16 arithmetic (tight comparison)."""
    w0, b0, w1, b1, wg_t, bg_t = fused_params
    B = x.shape[0]
    h = x.reshape(B, -1).astype(jnp.float32)
    h = jnp.maximum(jnp.dot(h.astype(jnp.bfloat16), w0,
                            preferred_element_type=jnp.float32) + b0, 0.0)
    h = jnp.maximum(jnp.dot(h.astype(jnp.bfloat16), w1,
                            preferred_element_type=jnp.float32) + b1, 0.0)
    y = jnp.dot(h.astype(jnp.bfloat16), wg_t.T,
                preferred_element_type=jnp.float32) + bg_t.T               # (B, 2)
    mu = y[:, 0:1]
    s = y[:, 1:2]
    sig = jnp.maximum(s, 0.0) + jnp.log(1.0 + jnp.exp(-jnp.abs(s))) + 1e-6
    return [mu, sig]


# ---------------------------------------------------------------------------
# Main
# ---------------------------------------------------------------------------
if __name__ == "__main__":
    n_tokens, latent_dim, seq_len = 4, 128, 80
    batch = 8

    key = jax.random.PRNGKey(0)
    pkey, xkey, xkey2 = jax.random.split(key, 3)
    raw_params = init_params(pkey, n_tokens=n_tokens, latent_dim=latent_dim, seq_len=seq_len)
    fused_params = prepare_params(raw_params)

    # --- small batch (single grid step; batch < one tile -> tiny pad path) ---
    x = jax.random.normal(xkey, (batch, n_tokens, seq_len), jnp.float32)
    mu, sig = ensemble_forward(x, fused_params)
    jax.block_until_ready((mu, sig))

    mu_bf, sig_bf = ensemble_forward_ref_fused(x, fused_params)
    mu_f32, sig_f32 = ensemble_forward_ref_f32(x, raw_params)

    assert mu.shape == (batch, 1) and sig.shape == (batch, 1)
    # Tight check vs. an arithmetic mirror of the kernel.
    assert jnp.allclose(mu, mu_bf, atol=1e-3, rtol=1e-3)
    assert jnp.allclose(sig, sig_bf, atol=1e-3, rtol=1e-3)
    # Loose check vs. the pure-f32 PyTorch-equivalent reference (bf16 MXU operands).
    assert jnp.allclose(mu, mu_f32, atol=5e-2, rtol=5e-2)
    assert jnp.allclose(sig, sig_f32, atol=5e-2, rtol=5e-2)
    assert bool(jnp.all(sig > 0))

    # --- larger batch exercising the multi-tile grid + ragged (unpadded) boundary tile ---
    B2 = 2000
    x2 = jax.random.normal(xkey2, (B2, n_tokens, seq_len), jnp.float32)
    mu2, sig2 = ensemble_forward(x2, fused_params)
    jax.block_until_ready((mu2, sig2))

    mu2_bf, sig2_bf = ensemble_forward_ref_fused(x2, fused_params)
    assert mu2.shape == (B2, 1) and sig2.shape == (B2, 1)
    assert jnp.allclose(mu2, mu2_bf, atol=1e-3, rtol=1e-3)
    assert jnp.allclose(sig2, sig2_bf, atol=1e-3, rtol=1e-3)
    assert bool(jnp.all(sig2 > 0))

    print("KERNEL_OK")
</pallas_src>

<mosaic_0001>
module attributes {stable_mosaic.version = 11 : i64} {
  func.func @ensemble_kernel(%arg0: i32, %arg1: memref<128x320xf32, #tpu.memory_space<vmem>>, %arg2: memref<320x128xbf16, #tpu.memory_space<vmem>>, %arg3: memref<1x128xf32, #tpu.memory_space<vmem>>, %arg4: memref<128x128xbf16, #tpu.memory_space<vmem>>, %arg5: memref<1x128xf32, #tpu.memory_space<vmem>>, %arg6: memref<2x128xbf16, #tpu.memory_space<vmem>>, %arg7: memref<2x1xf32, #tpu.memory_space<vmem>>, %arg8: memref<2x128xf32, #tpu.memory_space<vmem>>) attributes {dimension_semantics = [#tpu.dimension_semantics<parallel>], iteration_bounds = array<i64: 1>, scalar_prefetch = 0 : i64, scratch_operands = 0 : i64, tpu.core_type = #tpu.core_type<tc>, window_params = [{transform_indices = @transform_0, window_bounds = array<i64: 128, 320>}, {pipeline_mode = #tpu.pipeline_mode<synchronous>, transform_indices = @transform_1, window_bounds = array<i64: 320, 128>}, {pipeline_mode = #tpu.pipeline_mode<synchronous>, transform_indices = @transform_2, window_bounds = array<i64: 1, 128>}, {pipeline_mode = #tpu.pipeline_mode<synchronous>, transform_indices = @transform_3, window_bounds = array<i64: 128, 128>}, {pipeline_mode = #tpu.pipeline_mode<synchronous>, transform_indices = @transform_4, window_bounds = array<i64: 1, 128>}, {pipeline_mode = #tpu.pipeline_mode<synchronous>, transform_indices = @transform_5, window_bounds = array<i64: 2, 128>}, {pipeline_mode = #tpu.pipeline_mode<synchronous>, transform_indices = @transform_6, window_bounds = array<i64: 2, 1>}, {transform_indices = @transform_7, window_bounds = array<i64: 2, 128>}]} {
    %c0 = arith.constant 0 : index
    %c0_0 = arith.constant 0 : index
    %0 = vector.load %arg1[%c0, %c0_0] : memref<128x320xf32, #tpu.memory_space<vmem>>, vector<128x320xf32>
    %1 = arith.truncf %0 : vector<128x320xf32> to vector<128x320xbf16>
    %c0_1 = arith.constant 0 : index
    %c0_2 = arith.constant 0 : index
    %2 = vector.load %arg2[%c0_1, %c0_2] : memref<320x128xbf16, #tpu.memory_space<vmem>>, vector<320x128xbf16>
    %cst = arith.constant dense<0.000000e+00> : vector<128x128xf32>
    %3 = tpu.matmul %1, %2, %cst {dimension_numbers = #tpu.dot_dimension_numbers<[1], [0], [0], [1], [0, 0, 1, 1], [], []>} : vector<128x320xbf16>, vector<320x128xbf16>, vector<128x128xf32> -> vector<128x128xf32>
    %c0_3 = arith.constant 0 : index
    %c0_4 = arith.constant 0 : index
    %4 = vector.load %arg3[%c0_3, %c0_4] : memref<1x128xf32, #tpu.memory_space<vmem>>, vector<1x128xf32>
    %5 = vector.broadcast %4 : vector<1x128xf32> to vector<128x128xf32>
    %6 = arith.addf %3, %5 : vector<128x128xf32>
    %cst_5 = arith.constant 0.000000e+00 : f32
    %7 = vector.broadcast %cst_5 : f32 to vector<128x128xf32>
    %8 = arith.maximumf %6, %7 : vector<128x128xf32>
    %9 = arith.truncf %8 : vector<128x128xf32> to vector<128x128xbf16>
    %c0_6 = arith.constant 0 : index
    %c0_7 = arith.constant 0 : index
    %10 = vector.load %arg4[%c0_6, %c0_7] : memref<128x128xbf16, #tpu.memory_space<vmem>>, vector<128x128xbf16>
    %cst_8 = arith.constant dense<0.000000e+00> : vector<128x128xf32>
    %11 = tpu.matmul %9, %10, %cst_8 {dimension_numbers = #tpu.dot_dimension_numbers<[1], [0], [0], [1], [0, 0, 1, 1], [], []>} : vector<128x128xbf16>, vector<128x128xbf16>, vector<128x128xf32> -> vector<128x128xf32>
    %c0_9 = arith.constant 0 : index
    %c0_10 = arith.constant 0 : index
    %12 = vector.load %arg5[%c0_9, %c0_10] : memref<1x128xf32, #tpu.memory_space<vmem>>, vector<1x128xf32>
    %13 = vector.broadcast %12 : vector<1x128xf32> to vector<128x128xf32>
    %14 = arith.addf %11, %13 : vector<128x128xf32>
    %cst_11 = arith.constant 0.000000e+00 : f32
    %15 = vector.broadcast %cst_11 : f32 to vector<128x128xf32>
    %16 = arith.maximumf %14, %15 : vector<128x128xf32>
    %c0_12 = arith.constant 0 : index
    %c0_13 = arith.constant 0 : index
    %17 = vector.load %arg6[%c0_12, %c0_13] : memref<2x128xbf16, #tpu.memory_space<vmem>>, vector<2x128xbf16>
    %18 = arith.truncf %16 : vector<128x128xf32> to vector<128x128xbf16>
    "tpu.trace_start"() <{level = 10 : i32, message = "cl,bl->cb"}> : () -> ()
    %cst_14 = arith.constant dense<0.000000e+00> : vector<2x128xf32>
    %19 = tpu.matmul %17, %18, %cst_14 {dimension_numbers = #tpu.dot_dimension_numbers<[1], [1], [0], [0], [0, 0, 1, 0], [], []>} : vector<2x128xbf16>, vector<128x128xbf16>, vector<2x128xf32> -> vector<2x128xf32>
    "tpu.trace_stop"() : () -> ()
    %c0_15 = arith.constant 0 : index
    %c0_16 = arith.constant 0 : index
    %20 = vector.load %arg7[%c0_15, %c0_16] : memref<2x1xf32, #tpu.memory_space<vmem>>, vector<2x1xf32>
    %21 = vector.broadcast %20 : vector<2x1xf32> to vector<2x128xf32>
    %22 = arith.addf %19, %21 : vector<2x128xf32>
    %cst_17 = arith.constant 0.000000e+00 : f32
    %23 = vector.broadcast %cst_17 : f32 to vector<2x128xf32>
    %24 = arith.maximumf %22, %23 : vector<2x128xf32>
    %25 = math.absf %22 : vector<2x128xf32>
    %cst_18 = arith.constant 0.000000e+00 : f32
    %26 = vector.broadcast %cst_18 : f32 to vector<2x128xf32>
    %27 = arith.subf %26, %25 : vector<2x128xf32>
    %28 = math.exp %27 : vector<2x128xf32>
    %cst_19 = arith.constant 1.000000e+00 : f32
    %29 = vector.broadcast %cst_19 : f32 to vector<2x128xf32>
    %30 = arith.addf %29, %28 : vector<2x128xf32>
    %31 = math.log %30 : vector<2x128xf32>
    %32 = arith.addf %24, %31 : vector<2x128xf32>
    %cst_20 = arith.constant 9.99999997E-7 : f32
    %33 = vector.broadcast %cst_20 : f32 to vector<2x128xf32>
    %34 = arith.addf %32, %33 : vector<2x128xf32>
    %35 = tpu.iota {dimensions = array<i32: 0>} : vector<2x128xi32>
    %c1_i32 = arith.constant 1 : i32
    %36 = vector.broadcast %c1_i32 : i32 to vector<2x128xi32>
    %37 = arith.cmpi eq, %35, %36 : vector<2x128xi32>
    %38 = arith.select %37, %34, %22 : vector<2x128xi1>, vector<2x128xf32>
    %c0_21 = arith.constant 0 : index
    %c0_22 = arith.constant 0 : index
    %39 = vector.load %arg8[%c0_21, %c0_22] : memref<2x128xf32, #tpu.memory_space<vmem>>, vector<2x128xf32>
    tpu.vector_store %arg8[%c0_21, %c0_22], %38 {strides = array<i32>} : memref<2x128xf32, #tpu.memory_space<vmem>>, vector<2x128xf32>,
    return
  }
  func.func @transform_0(%arg0: i32) -> (i32, i32) {
    %c0_i32 = arith.constant 0 : i32
    %c0_i32_0 = arith.constant 0 : i32
    return %arg0, %c0_i32 : i32, i32
  }
  func.func @transform_1(%arg0: i32) -> (i32, i32) {
    %c0_i32 = arith.constant 0 : i32
    %c0_i32_0 = arith.constant 0 : i32
    %c0_i32_1 = arith.constant 0 : i32
    return %c0_i32, %c0_i32_0 : i32, i32
  }
  func.func @transform_2(%arg0: i32) -> (i32, i32) {
    %c0_i32 = arith.constant 0 : i32
    %c0_i32_0 = arith.constant 0 : i32
    %c0_i32_1 = arith.constant 0 : i32
    return %c0_i32, %c0_i32_0 : i32, i32
  }
  func.func @transform_3(%arg0: i32) -> (i32, i32) {
    %c0_i32 = arith.constant 0 : i32
    %c0_i32_0 = arith.constant 0 : i32
    %c0_i32_1 = arith.constant 0 : i32
    return %c0_i32, %c0_i32_0 : i32, i32
  }
  func.func @transform_4(%arg0: i32) -> (i32, i32) {
    %c0_i32 = arith.constant 0 : i32
    %c0_i32_0 = arith.constant 0 : i32
    %c0_i32_1 = arith.constant 0 : i32
    return %c0_i32, %c0_i32_0 : i32, i32
  }
  func.func @transform_5(%arg0: i32) -> (i32, i32) {
    %c0_i32 = arith.constant 0 : i32
    %c0_i32_0 = arith.constant 0 : i32
    %c0_i32_1 = arith.constant 0 : i32
    return %c0_i32, %c0_i32_0 : i32, i32
  }
  func.func @transform_6(%arg0: i32) -> (i32, i32) {
    %c0_i32 = arith.constant 0 : i32
    %c0_i32_0 = arith.constant 0 : i32
    %c0_i32_1 = arith.constant 0 : i32
    return %c0_i32, %c0_i32_0 : i32, i32
  }
  func.func @transform_7(%arg0: i32) -> (i32, i32) {
    %c0_i32 = arith.constant 0 : i32
    %c0_i32_0 = arith.constant 0 : i32
    return %c0_i32, %arg0 : i32, i32
  }
}

</mosaic_0001>

<llo_original>
// kernel: tpu_custom_call.1
$region0: #{tpu_custom_call.1}
  #allocation0 [shape = 'u32[]', space=smem, size = 0x4, offset = 0x4, fixed_abs, tag = 'smem constant byte address 0x4 - core index']
  #allocation1 [shape = 'u32[144,128]{1,0:T(1,128)}', space=vmem, size = 0x12000, scoped, tag = 'internal scratch']
  %s0 = inlined_call_operand.vmem [shape: f32[128,320], index: 0, kind: input, shape index: {}]
  %s1 = inlined_call_operand.vmem [shape: bf16[320,128], index: 1, kind: input, shape index: {}]
  %s2 = inlined_call_operand.vmem [shape: f32[1,128], index: 2, kind: input, shape index: {}]
  %s3 = inlined_call_operand.vmem [shape: bf16[128,128], index: 3, kind: input, shape index: {}]
  %s4 = inlined_call_operand.vmem [shape: f32[1,128], index: 4, kind: input, shape index: {}]
  %s5 = inlined_call_operand.vmem [shape: bf16[2,128], index: 5, kind: input, shape index: {}]
  %s6 = inlined_call_operand.vmem [shape: f32[2,1], index: 6, kind: input, shape index: {}]
  %s7 = inlined_call_operand.hbm [shape: f32[2,128], index: 7, kind: output, shape index: {}]
  %s8 = sld [smem:[#allocation0]]
  $region38: #{tpu_custom_call.1} parent=0
    _
  %s10 = ssub.s32 1, %s8
  %s11 = scalar_select 0, %s10, %s8
  $region1: #{tpu_custom_call.1} parent=0
    #allocation2 [shape = 'u8[1024]{0}', space=vmem, size = 0x400, scoped, tag = 'output window, operand 0, single buffered']
    #allocation3 [shape = 's32[1]{0}', space=sflag, size = 0x4, scoped, tag = 'scoped memory for tpu_custom_call.1']
    %12 = vsyncpa [#allocation3], 0
    // Predicated region
    $region2: #{tpu_custom_call.1} parent=1 // pred_check
      _
    $region3: #{tpu_custom_call.1} parent=1 // pred_check_branch
      %14 = sbr.rel (0) target = $region5
    $region4: #{tpu_custom_call.1} parent=1 // pred_region
      _
    $region5: #{tpu_custom_call.1} parent=1 // pred_fallthru
      _
    // Predicated region
    $region6: #{tpu_custom_call.1} parent=1 // pred_check
      _
    $region7: #{tpu_custom_call.1} parent=1 // pred_check_branch
      %16 = sbr.rel (0) target = $region9
    $region8: #{tpu_custom_call.1} parent=1 // pred_region
      _
    $region9: #{tpu_custom_call.1} parent=1 // pred_fallthru
      _
    // Predicated region
    $region10: #{tpu_custom_call.1} parent=1 // pred_check
      _
    $region11: #{tpu_custom_call.1} parent=1 // pred_check_branch
      %18 = sbr.rel (0) target = $region13
    $region12: #{tpu_custom_call.1} parent=1 // pred_region
      _
    $region13: #{tpu_custom_call.1} parent=1 // pred_fallthru
      _
    // Predicated region
    $region14: #{tpu_custom_call.1} parent=1 // pred_check
      _
    $region15: #{tpu_custom_call.1} parent=1 // pred_check_branch
      %20 = sbr.rel (0) target = $region17
    $region16: #{tpu_custom_call.1} parent=1 // pred_region
      _
    $region17: #{tpu_custom_call.1} parent=1 // pred_fallthru
      _
    // Predicated region
    $region18: #{tpu_custom_call.1} parent=1 // pred_check
      _
    $region19: #{tpu_custom_call.1} parent=1 // pred_check_branch
      %22 = sbr.rel (0) target = $region21
    $region20: #{tpu_custom_call.1} parent=1 // pred_region
      _
    $region21: #{tpu_custom_call.1} parent=1 // pred_fallthru
      _
    // Predicated region
    $region22: #{tpu_custom_call.1} parent=1 // pred_check
      _
    $region23: #{tpu_custom_call.1} parent=1 // pred_check_branch
      %24 = sbr.rel (0) target = $region25
    $region24: #{tpu_custom_call.1} parent=1 // pred_region
      _
    $region25: #{tpu_custom_call.1} parent=1 // pred_fallthru
      _
    // Predicated region
    $region26: #{tpu_custom_call.1} parent=1 // pred_check
      _
    $region27: #{tpu_custom_call.1} parent=1 // pred_check_branch
      %26 = sbr.rel (0) target = $region29
    $region28: #{tpu_custom_call.1} parent=1 // pred_region
      _
    $region29: #{tpu_custom_call.1} parent=1 // pred_fallthru
      _
    %v28 = vld [vmem:[%s0] sm:$0xff]
    %v29 = vld [vmem:[%s0 + $0x8] sm:$0xff]
    %v30 = vld [vmem:[%s0 + $0x10] sm:$0xff]
    %v31 = vld [vmem:[%s0 + $0x18] sm:$0xff]
    %v32 = vld [vmem:[%s0 + $0x20] sm:$0xff]
    %v33 = vld [vmem:[%s0 + $0x28] sm:$0xff]
    %v34 = vld [vmem:[%s0 + $0x30] sm:$0xff]
    %v35 = vld [vmem:[%s0 + $0x38] sm:$0xff]
    %v36 = vld [vmem:[%s0 + $0x40] sm:$0xff]
    %v37 = vld [vmem:[%s0 + $0x48] sm:$0xff]
    %v38 = vld [vmem:[%s0 + $0x50] sm:$0xff]
    %v39 = vld [vmem:[%s0 + $0x58] sm:$0xff]
    %v40 = vld [vmem:[%s0 + $0x60] sm:$0xff]
    %v41 = vld [vmem:[%s0 + $0x68] sm:$0xff]
    %v42 = vld [vmem:[%s0 + $0x70] sm:$0xff]
    %v43 = vld [vmem:[%s0 + $0x78] sm:$0xff]
    %v44 = vld [vmem:[%s0 + $0x80] sm:$0xff]
    %v45 = vld [vmem:[%s0 + $0x88] sm:$0xff]
    %v46 = vld [vmem:[%s0 + $0x90] sm:$0xff]
    %v47 = vld [vmem:[%s0 + $0x98] sm:$0xff]
    %v48 = vld [vmem:[%s0 + $0xa0] sm:$0xff]
    %v49 = vld [vmem:[%s0 + $0xa8] sm:$0xff]
    %v50 = vld [vmem:[%s0 + $0xb0] sm:$0xff]
    %v51 = vld [vmem:[%s0 + $0xb8] sm:$0xff]
    %v52 = vld [vmem:[%s0 + $0xc0] sm:$0xff]
    %v53 = vld [vmem:[%s0 + $0xc8] sm:$0xff]
    %v54 = vld [vmem:[%s0 + $0xd0] sm:$0xff]
    %v55 = vld [vmem:[%s0 + $0xd8] sm:$0xff]
    %v56 = vld [vmem:[%s0 + $0xe0] sm:$0xff]
    %v57 = vld [vmem:[%s0 + $0xe8] sm:$0xff]
    %v58 = vld [vmem:[%s0 + $0xf0] sm:$0xff]
    %v59 = vld [vmem:[%s0 + $0xf8] sm:$0xff]
    %v60 = vld [vmem:[%s0 + $0x100] sm:$0xff]
    %v61 = vld [vmem:[%s0 + $0x108] sm:$0xff]
    %v62 = vld [vmem:[%s0 + $0x110] sm:$0xff]
    %v63 = vld [vmem:[%s0 + $0x118] sm:$0xff]
    %v64 = vld [vmem:[%s0 + $0x120] sm:$0xff]
    %v65 = vld [vmem:[%s0 + $0x128] sm:$0xff]
    %v66 = vld [vmem:[%s0 + $0x130] sm:$0xff]
    %v67 = vld [vmem:[%s0 + $0x138] sm:$0xff]
    %v68 = vld [vmem:[%s0 + $0x140] sm:$0xff]
    %v69 = vld [vmem:[%s0 + $0x148] sm:$0xff]
    %v70 = vld [vmem:[%s0 + $0x150] sm:$0xff]
    %v71 = vld [vmem:[%s0 + $0x158] sm:$0xff]
    %v72 = vld [vmem:[%s0 + $0x160] sm:$0xff]
    %v73 = vld [vmem:[%s0 + $0x168] sm:$0xff]
    %v74 = vld [vmem:[%s0 + $0x170] sm:$0xff]
    %v75 = vld [vmem:[%s0 + $0x178] sm:$0xff]
    %v76 = vpack.c.bf16 %v31, %v28
    %v77 = vpack.c.bf16 %v32, %v29
    %v78 = vpack.c.bf16 %v33, %v30
    %v79 = vpack.c.bf16 %v37, %v34
    %v80 = vpack.c.bf16 %v38, %v35
    %v81 = vpack.c.bf16 %v39, %v36
    %v82 = vpack.c.bf16 %v43, %v40
    %v83 = vpack.c.bf16 %v44, %v41
    %v84 = vpack.c.bf16 %v45, %v42
    %v85 = vpack.c.bf16 %v49, %v46
    %v86 = vpack.c.bf16 %v50, %v47
    %v87 = vpack.c.bf16 %v51, %v48
    %v88 = vpack.c.bf16 %v55, %v52
    %v89 = vpack.c.bf16 %v56, %v53
    %v90 = vpack.c.bf16 %v57, %v54
    %v91 = vpack.c.bf16 %v61, %v58
    %v92 = vpack.c.bf16 %v62, %v59
    %v93 = vpack.c.bf16 %v63, %v60
    %v94 = vpack.c.bf16 %v67, %v64
    %v95 = vpack.c.bf16 %v68, %v65
    %v96 = vpack.c.bf16 %v69, %v66
    %v97 = vpack.c.bf16 %v73, %v70
    %v98 = vpack.c.bf16 %v74, %v71
    %v99 = vpack.c.bf16 %v75, %v72
    %v100 = vld [vmem:[%s1] sm:$0xf]
    %v101 = vld [vmem:[%s1 + $0x4] sm:$0xf]
    %v102 = vld [vmem:[%s1 + $0x8] sm:$0xf]
    %v103 = vld [vmem:[%s1 + $0xc] sm:$0xf]
    %v104 = vld [vmem:[%s1 + $0x10] sm:$0xf]
    %v105 = vld [vmem:[%s1 + $0x14] sm:$0xf]
    %v106 = vld [vmem:[%s1 + $0x18] sm:$0xf]
    %v107 = vld [vmem:[%s1 + $0x1c] sm:$0xf]
    %v108 = vld [vmem:[%s1 + $0x20] sm:$0xf]
    %v109 = vld [vmem:[%s1 + $0x24] sm:$0xf]
    %v110 = vld [vmem:[%s1 + $0x28] sm:$0xf]
    %v111 = vld [vmem:[%s1 + $0x2c] sm:$0xf]
    %v112 = vld [vmem:[%s1 + $0x30] sm:$0xf]
    %v113 = vld [vmem:[%s1 + $0x34] sm:$0xf]
    %v114 = vld [vmem:[%s1 + $0x38] sm:$0xf]
    %v115 = vld [vmem:[%s1 + $0x3c] sm:$0xf]
    %v116 = vld [vmem:[%s1 + $0x40] sm:$0xf]
    %v117 = vld [vmem:[%s1 + $0x44] sm:$0xf]
    %v118 = vld [vmem:[%s1 + $0x48] sm:$0xf]
    %v119 = vld [vmem:[%s1 + $0x4c] sm:$0xf]
    %v120 = vld [vmem:[%s1 + $0x50] sm:$0xf]
    %v121 = vld [vmem:[%s1 + $0x54] sm:$0xf]
    %v122 = vld [vmem:[%s1 + $0x58] sm:$0xf]
    %v123 = vld [vmem:[%s1 + $0x5c] sm:$0xf]
    %v124 = vld [vmem:[%s1 + $0x60] sm:$0xf]
    %v125 = vld [vmem:[%s1 + $0x64] sm:$0xf]
    %v126 = vld [vmem:[%s1 + $0x68] sm:$0xf]
    %v127 = vld [vmem:[%s1 + $0x6c] sm:$0xf]
    %v128 = vld [vmem:[%s1 + $0x70] sm:$0xf]
    %v129 = vld [vmem:[%s1 + $0x74] sm:$0xf]
    %v130 = vld [vmem:[%s1 + $0x78] sm:$0xf]
    %v131 = vld [vmem:[%s1 + $0x7c] sm:$0xf]
    %v132 = vld [vmem:[%s1 + $0x80] sm:$0xf]
    %v133 = vld [vmem:[%s1 + $0x84] sm:$0xf]
    %v134 = vld [vmem:[%s1 + $0x88] sm:$0xf]
    %v135 = vld [vmem:[%s1 + $0x8c] sm:$0xf]
    %v136 = vld [vmem:[%s1 + $0x90] sm:$0xf]
    %v137 = vld [vmem:[%s1 + $0x94] sm:$0xf]
    %v138 = vld [vmem:[%s1 + $0x98] sm:$0xf]
    %v139 = vld [vmem:[%s1 + $0x9c] sm:$0xf]
    %v140 = vld [vmem:[%s2] sm:$0x1]
    %v142 = vlaneseq
    %v143 = vshrl.u32 %v142, 7
    %v144 = vsub.s32 0, %v143
    %v145 = vrot.slane %v140, %v144
    %v187 = vunpack.c.l.b16 %v100
    %v188 = vunpack.c.l.b16 %v101
    %v189 = vunpack.c.l.b16 %v102
    %v190 = vunpack.c.l.b16 %v103
    %v191 = vunpack.c.l.b16 %v104
    %v192 = vunpack.c.l.b16 %v105
    %v193 = vunpack.c.l.b16 %v106
    %v194 = vunpack.c.l.b16 %v107
    %v195 = vunpack.c.l.b16 %v108
    %v196 = vunpack.c.l.b16 %v109
    %v197 = vunpack.c.l.b16 %v110
    %v198 = vunpack.c.l.b16 %v111
    %v199 = vunpack.c.l.b16 %v112
    %v200 = vunpack.c.l.b16 %v113
    %v201 = vunpack.c.l.b16 %v114
    %v202 = vunpack.c.l.b16 %v115
    %v203 = vunpack.c.l.b16 %v116
    %v204 = vunpack.c.l.b16 %v117
    %v205 = vunpack.c.l.b16 %v118
    %v206 = vunpack.c.l.b16 %v119
    %v207 = vunpack.c.l.b16 %v120
    %v208 = vunpack.c.l.b16 %v121
    %v209 = vunpack.c.l.b16 %v122
    %v210 = vunpack.c.l.b16 %v123
    %v211 = vunpack.c.l.b16 %v124
    %v212 = vunpack.c.l.b16 %v125
    %v213 = vunpack.c.l.b16 %v126
    %v214 = vunpack.c.l.b16 %v127
    %v215 = vunpack.c.l.b16 %v128
    %v216 = vunpack.c.l.b16 %v129
    %v217 = vunpack.c.l.b16 %v130
    %v218 = vunpack.c.l.b16 %v131
    %v219 = vunpack.c.l.b16 %v132
    %v220 = vunpack.c.l.b16 %v133
    %v221 = vunpack.c.l.b16 %v134
    %v222 = vunpack.c.l.b16 %v135
    %v223 = vunpack.c.l.b16 %v136
    %v224 = vunpack.c.l.b16 %v137
    %v225 = vunpack.c.l.b16 %v138
    %v226 = vunpack.c.l.b16 %v139
    %v227 = vpack.c.b16 %v188, %v187
    %v228 = vpack.c.b16 %v190, %v189
    %v229 = vpack.c.b16 %v192, %v191
    %v230 = vpack.c.b16 %v194, %v193
    %v231 = vpack.c.b16 %v196, %v195
    %v232 = vpack.c.b16 %v198, %v197
    %v233 = vpack.c.b16 %v200, %v199
    %v234 = vpack.c.b16 %v202, %v201
    %v235 = vpack.c.b16 %v204, %v203
    %v236 = vpack.c.b16 %v206, %v205
    %v237 = vpack.c.b16 %v208, %v207
    %v238 = vpack.c.b16 %v210, %v209
    %v239 = vpack.c.b16 %v212, %v211
    %v240 = vpack.c.b16 %v214, %v213
    %v241 = vpack.c.b16 %v216, %v215
    %v242 = vpack.c.b16 %v218, %v217
    %v243 = vpack.c.b16 %v220, %v219
    %v244 = vpack.c.b16 %v222, %v221
    %v245 = vpack.c.b16 %v224, %v223
    %v246 = vpack.c.b16 %v226, %v225
    %vm267 = vcmask 523264
    %v269 = vsel %vm267, %v78, 0
    %v272 = vsel %vm267, %v81, 0
    %v275 = vsel %vm267, %v84, 0
    %v278 = vsel %vm267, %v87, 0
    %v281 = vsel %vm267, %v90, 0
    %v284 = vsel %vm267, %v93, 0
    %v287 = vsel %vm267, %v96, 0
    %v290 = vsel %vm267, %v99, 0
    %292 = vmatprep.subr.bf16.mxu0 0
    %293 = vmatpush1.bf16.msra.mxu0 %v227
    %294 = vmatprep.subr.bf16.mxu0 0
    %295 = vmatpush1.bf16.msra.mxu0 %v228
    %296 = vmatprep.subr.bf16.mxu0 0
    %297 = vmatpush1.bf16.msra.mxu0 %v229
    %298 = vmatprep.subr.bf16.mxu0 0
    %299 = vmatpush1.bf16.msra.mxu0 %v230
    %300 = vmatprep.subr.bf16.mxu0 0
    %301 = vmatpush1.bf16.msra.mxu0 %v231
    %302 = vmatprep.subr.bf16.mxu0 0
    %303 = vmatpush1.bf16.msra.mxu0 %v232
    %304 = vmatprep.subr.bf16.mxu0 0
    %305 = vmatpush1.bf16.msra.mxu0 %v233
    %306 = vmatprep.subr.bf16.mxu0 0
    %307 = vmatpush1.bf16.msra.mxu0 %v234
    %308 = vmatprep.subr.bf16.mxu0 0
    %309 = vmatpush1.bf16.msra.mxu0 %v235
    %310 = vmatprep.subr.bf16.mxu0 0
    %311 = vmatpush1.bf16.msra.mxu0 %v236
    %312 = vmatprep.subr.bf16.mxu0 0
    %313 = vmatpush1.bf16.msra.mxu0 %v237
    %314 = vmatprep.subr.bf16.mxu0 0
    %315 = vmatpush1.bf16.msra.mxu0 %v238
    %316 = vmatprep.subr.bf16.mxu0 0
    %317 = vmatpush1.bf16.msra.mxu0 %v239
    %318 = vmatprep.subr.bf16.mxu0 0
    %319 = vmatpush1.bf16.msra.mxu0 %v240
    %320 = vmatprep.subr.bf16.mxu0 0
    %321 = vmatpush1.bf16.msra.mxu0 %v241
    %322 = vmatprep.subr.bf16.mxu0 0
    %323 = vmatpush1.bf16.msra.mxu0 %v242
    %324 = vmatprep.mubr.bf16.mxu0 %v77
    %325 = vmatmul.mubr.bf16.gmra.mrb[0].mxu0 %v76
    %v326 = vpop.f32.mrb[0].mxu0
    %v327 = vadd.f32 %v145, %v326
    %v328 = vpop.f32.mrb[0].mxu0
    %v329 = vpop.f32.mrb[0].mxu0
    %v330 = vadd.f32 %v145, %v329
    %v331 = vpop.f32.mrb[0].mxu0
    %332 = vmatprep.mubr.bf16.mxu0 %v80
    %333 = vmatmul.mubr.bf16.gmra.mrb[0].mxu0 %v79
    %v334 = vpop.f32.mrb[0].mxu0
    %v335 = vadd.f32 %v145, %v334
    %v336 = vpop.f32.mrb[0].mxu0
    %v337 = vpop.f32.mrb[0].mxu0
    %v338 = vadd.f32 %v145, %v337
    %v339 = vpop.f32.mrb[0].mxu0
    %340 = vmatprep.mubr.bf16.mxu0 %v83
    %341 = vmatmul.mubr.bf16.gmra.mrb[0].mxu0 %v82
    %v342 = vpop.f32.mrb[0].mxu0
    %v343 = vadd.f32 %v145, %v342
    %v344 = vpop.f32.mrb[0].mxu0
    %v345 = vpop.f32.mrb[0].mxu0
    %v346 = vadd.f32 %v145, %v345
    %v347 = vpop.f32.mrb[0].mxu0
    %348 = vmatprep.mubr.bf16.mxu0 %v86
    %349 = vmatmul.mubr.bf16.gmra.mrb[0].mxu0 %v85
    %v350 = vpop.f32.mrb[0].mxu0
    %v351 = vadd.f32 %v145, %v350
    %v352 = vpop.f32.mrb[0].mxu0
    %v353 = vpop.f32.mrb[0].mxu0
    %v354 = vadd.f32 %v145, %v353
    %v355 = vpop.f32.mrb[0].mxu0
    %356 = vmatprep.mubr.bf16.mxu0 %v89
    %357 = vmatmul.mubr.bf16.gmra.mrb[0].mxu0 %v88
    %v358 = vpop.f32.mrb[0].mxu0
    %v359 = vadd.f32 %v145, %v358
    %v360 = vpop.f32.mrb[0].mxu0
    %v361 = vpop.f32.mrb[0].mxu0
    %v362 = vadd.f32 %v145, %v361
    %v363 = vpop.f32.mrb[0].mxu0
    %364 = vmatprep.mubr.bf16.mxu0 %v92
    %365 = vmatmul.mubr.bf16.gmra.mrb[0].mxu0 %v91
    %v366 = vpop.f32.mrb[0].mxu0
    %v367 = vadd.f32 %v145, %v366
    %v368 = vpop.f32.mrb[0].mxu0
    %v369 = vpop.f32.mrb[0].mxu0
    %v370 = vadd.f32 %v145, %v369
    %v371 = vpop.f32.mrb[0].mxu0
    %372 = vmatprep.mubr.bf16.mxu0 %v95
    %373 = vmatmul.mubr.bf16.gmra.mrb[0].mxu0 %v94
    %v374 = vpop.f32.mrb[0].mxu0
    %v375 = vadd.f32 %v145, %v374
    %v376 = vpop.f32.mrb[0].mxu0
    %v377 = vpop.f32.mrb[0].mxu0
    %v378 = vadd.f32 %v145, %v377
    %v379 = vpop.f32.mrb[0].mxu0
    %380 = vmatprep.mubr.bf16.mxu0 %v98
    %381 = vmatmul.mubr.bf16.gmra.mrb[0].mxu0 %v97
    %v382 = vpop.f32.mrb[0].mxu0
    %v383 = vadd.f32 %v145, %v382
    %v384 = vpop.f32.mrb[0].mxu0
    %v385 = vpop.f32.mrb[0].mxu0
    %v386 = vadd.f32 %v145, %v385
    %v387 = vpop.f32.mrb[0].mxu0
    %388 = vdwg.mxu0
    %389 = vmatprep.subr.bf16.mxu0 0
    %390 = vmatpush1.bf16.msra.mxu0 %v243
    %391 = vmatprep.subr.bf16.mxu0 0
    %392 = vmatpush1.bf16.msra.mxu0 %v244
    %393 = vmatprep.subr.bf16.mxu0 0
    %394 = vmatpush1.bf16.msra.mxu0 %v245
    %395 = vmatprep.subr.bf16.mxu0 0
    %396 = vmatpush1.bf16.msra.mxu0 %v246
    %397 = vmatprep.subr.bf16.mxu0 0
    %398 = vmatpush1.bf16.msra.mxu0 0
    %399 = vmatprep.subr.bf16.mxu0 0
    %400 = vmatpush1.bf16.msra.mxu0 0
    %401 = vmatprep.subr.bf16.mxu0 0
    %402 = vmatpush1.bf16.msra.mxu0 0
    %403 = vmatprep.subr.bf16.mxu0 0
    %404 = vmatpush1.bf16.msra.mxu0 0
    %405 = vmatprep.subr.bf16.mxu0 0
    %406 = vmatpush1.bf16.msra.mxu0 0
    %407 = vmatprep.subr.bf16.mxu0 0
    %408 = vmatpush1.bf16.msra.mxu0 0
    %409 = vmatprep.subr.bf16.mxu0 0
    %410 = vmatpush1.bf16.msra.mxu0 0
    %411 = vmatprep.subr.bf16.mxu0 0
    %412 = vmatpush1.bf16.msra.mxu0 0
    %413 = vmatprep.subr.bf16.mxu0 0
    %414 = vmatpush1.bf16.msra.mxu0 0
    %415 = vmatprep.subr.bf16.mxu0 0
    %416 = vmatpush1.bf16.msra.mxu0 0
    %417 = vmatprep.subr.bf16.mxu0 0
    %418 = vmatpush1.bf16.msra.mxu0 0
    %419 = vmatprep.subr.bf16.mxu0 0
    %420 = vmatpush1.bf16.msra.mxu0 0
    %421 = vmatprep.mubr.bf16.mxu0 0
    %422 = vmatmul.mubr.bf16.gmra.mrb[0].mxu0 %v269
    %v423 = vpop.f32.mrb[0].mxu0
    %v424 = vadd.f32 %v327, %v423
    %v425 = vpop.f32.mrb[0].mxu0
    %v426 = vpop.f32.mrb[0].mxu0
    %v427 = vadd.f32 %v330, %v426
    %v428 = vpop.f32.mrb[0].mxu0
    %429 = vmatprep.mubr.bf16.mxu0 0
    %430 = vmatmul.mubr.bf16.gmra.mrb[0].mxu0 %v272
    %v431 = vpop.f32.mrb[0].mxu0
    %v432 = vadd.f32 %v335, %v431
    %v433 = vpop.f32.mrb[0].mxu0
    %v434 = vpop.f32.mrb[0].mxu0
    %v435 = vadd.f32 %v338, %v434
    %v436 = vpop.f32.mrb[0].mxu0
    %437 = vmatprep.mubr.bf16.mxu0 0
    %438 = vmatmul.mubr.bf16.gmra.mrb[0].mxu0 %v275
    %v439 = vpop.f32.mrb[0].mxu0
    %v440 = vadd.f32 %v343, %v439
    %v441 = vpop.f32.mrb[0].mxu0
    %v442 = vpop.f32.mrb[0].mxu0
    %v443 = vadd.f32 %v346, %v442
    %v444 = vpop.f32.mrb[0].mxu0
    %445 = vmatprep.mubr.bf16.mxu0 0
    %446 = vmatmul.mubr.bf16.gmra.mrb[0].mxu0 %v278
    %v447 = vpop.f32.mrb[0].mxu0
    %v448 = vadd.f32 %v351, %v447
    %v449 = vpop.f32.mrb[0].mxu0
    %v450 = vpop.f32.mrb[0].mxu0
    %v451 = vadd.f32 %v354, %v450
    %v452 = vpop.f32.mrb[0].mxu0
    %453 = vmatprep.mubr.bf16.mxu0 0
    %454 = vmatmul.mubr.bf16.gmra.mrb[0].mxu0 %v281
    %v455 = vpop.f32.mrb[0].mxu0
    %v456 = vadd.f32 %v359, %v455
    %v457 = vpop.f32.mrb[0].mxu0
    %v458 = vpop.f32.mrb[0].mxu0
    %v459 = vadd.f32 %v362, %v458
    %v460 = vpop.f32.mrb[0].mxu0
    %461 = vmatprep.mubr.bf16.mxu0 0
    %462 = vmatmul.mubr.bf16.gmra.mrb[0].mxu0 %v284
    %v463 = vpop.f32.mrb[0].mxu0
    %v464 = vadd.f32 %v367, %v463
    %v465 = vpop.f32.mrb[0].mxu0
    %v466 = vpop.f32.mrb[0].mxu0
    %v467 = vadd.f32 %v370, %v466
    %v468 = vpop.f32.mrb[0].mxu0
    %469 = vmatprep.mubr.bf16.mxu0 0
    %470 = vmatmul.mubr.bf16.gmra.mrb[0].mxu0 %v287
    %v471 = vpop.f32.mrb[0].mxu0
    %v472 = vadd.f32 %v375, %v471
    %v473 = vpop.f32.mrb[0].mxu0
    %v474 = vpop.f32.mrb[0].mxu0
    %v475 = vadd.f32 %v378, %v474
    %v476 = vpop.f32.mrb[0].mxu0
    %477 = vmatprep.mubr.bf16.mxu0 0
    %478 = vmatmul.mubr.bf16.gmra.mrb[0].mxu0 %v290
    %v479 = vpop.f32.mrb[0].mxu0
    %v480 = vadd.f32 %v383, %v479
    %v481 = vpop.f32.mrb[0].mxu0
    %v482 = vpop.f32.mrb[0].mxu0
    %v483 = vadd.f32 %v386, %v482
    %v484 = vpop.f32.mrb[0].mxu0
    %485 = vdwg.mxu0
    %v486 = vmax.f32 %v424, 0.0
    %v487 = vmax.f32 %v427, 0.0
    %v488 = vmax.f32 %v432, 0.0
    %v489 = vmax.f32 %v435, 0.0
    %v490 = vmax.f32 %v440, 0.0
    %v491 = vmax.f32 %v443, 0.0
    %v492 = vmax.f32 %v448, 0.0
    %v493 = vmax.f32 %v451, 0.0
    %v494 = vmax.f32 %v456, 0.0
    %v495 = vmax.f32 %v459, 0.0
    %v496 = vmax.f32 %v464, 0.0
    %v497 = vmax.f32 %v467, 0.0
    %v498 = vmax.f32 %v472, 0.0
    %v499 = vmax.f32 %v475, 0.0
    %v500 = vmax.f32 %v480, 0.0
    %v501 = vmax.f32 %v483, 0.0
    %v502 = vpack.c.bf16 %v487, %v486
    %v503 = vpack.c.bf16 %v489, %v488
    %v504 = vpack.c.bf16 %v491, %v490
    %v505 = vpack.c.bf16 %v493, %v492
    %v506 = vpack.c.bf16 %v495, %v494
    %v507 = vpack.c.bf16 %v497, %v496
    %v508 = vpack.c.bf16 %v499, %v498
    %v509 = vpack.c.bf16 %v501, %v500
    %v510 = vld [vmem:[%s3] sm:$0xf]
    %v511 = vld [vmem:[%s3 + $0x4] sm:$0xf]
    %v512 = vld [vmem:[%s3 + $0x8] sm:$0xf]
    %v513 = vld [vmem:[%s3 + $0xc] sm:$0xf]
    %v514 = vld [vmem:[%s3 + $0x10] sm:$0xf]
    %v515 = vld [vmem:[%s3 + $0x14] sm:$0xf]
    %v516 = vld [vmem:[%s3 + $0x18] sm:$0xf]
    %v517 = vld [vmem:[%s3 + $0x1c] sm:$0xf]
    %v518 = vld [vmem:[%s3 + $0x20] sm:$0xf]
    %v519 = vld [vmem:[%s3 + $0x24] sm:$0xf]
    %v520 = vld [vmem:[%s3 + $0x28] sm:$0xf]
    %v521 = vld [vmem:[%s3 + $0x2c] sm:$0xf]
    %v522 = vld [vmem:[%s3 + $0x30] sm:$0xf]
    %v523 = vld [vmem:[%s3 + $0x34] sm:$0xf]
    %v524 = vld [vmem:[%s3 + $0x38] sm:$0xf]
    %v525 = vld [vmem:[%s3 + $0x3c] sm:$0xf]
    %v526 = vld [vmem:[%s4] sm:$0x1]
    %v528 = vlaneseq
    %v529 = vshrl.u32 %v528, 7
    %v530 = vsub.s32 0, %v529
    %v531 = vrot.slane %v526, %v530
    %v549 = vunpack.c.l.b16 %v510
    %v550 = vunpack.c.l.b16 %v511
    %v551 = vunpack.c.l.b16 %v512
    %v552 = vunpack.c.l.b16 %v513
    %v553 = vunpack.c.l.b16 %v514
    %v554 = vunpack.c.l.b16 %v515
    %v555 = vunpack.c.l.b16 %v516
    %v556 = vunpack.c.l.b16 %v517
    %v557 = vunpack.c.l.b16 %v518
    %v558 = vunpack.c.l.b16 %v519
    %v559 = vunpack.c.l.b16 %v520
    %v560 = vunpack.c.l.b16 %v521
    %v561 = vunpack.c.l.b16 %v522
    %v562 = vunpack.c.l.b16 %v523
    %v563 = vunpack.c.l.b16 %v524
    %v564 = vunpack.c.l.b16 %v525
    %v565 = vpack.c.b16 %v550, %v549
    %v566 = vpack.c.b16 %v552, %v551
    %v567 = vpack.c.b16 %v554, %v553
    %v568 = vpack.c.b16 %v556, %v555
    %v569 = vpack.c.b16 %v558, %v557
    %v570 = vpack.c.b16 %v560, %v559
    %v571 = vpack.c.b16 %v562, %v561
    %v572 = vpack.c.b16 %v564, %v563
    %581 = vmatprep.subr.bf16.mxu0 0
    %582 = vmatpush1.bf16.msra.mxu0 %v565
    %583 = vmatprep.subr.bf16.mxu0 0
    %584 = vmatpush1.bf16.msra.mxu0 %v566
    %585 = vmatprep.subr.bf16.mxu0 0
    %586 = vmatpush1.bf16.msra.mxu0 %v567
    %587 = vmatprep.subr.bf16.mxu0 0
    %588 = vmatpush1.bf16.msra.mxu0 %v568
    %589 = vmatprep.subr.bf16.mxu0 0
    %590 = vmatpush1.bf16.msra.mxu0 %v569
    %591 = vmatprep.subr.bf16.mxu0 0
    %592 = vmatpush1.bf16.msra.mxu0 %v570
    %593 = vmatprep.subr.bf16.mxu0 0
    %594 = vmatpush1.bf16.msra.mxu0 %v571
    %595 = vmatprep.subr.bf16.mxu0 0
    %596 = vmatpush1.bf16.msra.mxu0 %v572
    %597 = vmatprep.subr.bf16.mxu0 0
    %598 = vmatpush1.bf16.msra.mxu0 0
    %599 = vmatprep.subr.bf16.mxu0 0
    %600 = vmatpush1.bf16.msra.mxu0 0
    %601 = vmatprep.subr.bf16.mxu0 0
    %602 = vmatpush1.bf16.msra.mxu0 0
    %603 = vmatprep.subr.bf16.mxu0 0
    %604 = vmatpush1.bf16.msra.mxu0 0
    %605 = vmatprep.subr.bf16.mxu0 0
    %606 = vmatpush1.bf16.msra.mxu0 0
    %607 = vmatprep.subr.bf16.mxu0 0
    %608 = vmatpush1.bf16.msra.mxu0 0
    %609 = vmatprep.subr.bf16.mxu0 0
    %610 = vmatpush1.bf16.msra.mxu0 0
    %611 = vmatprep.subr.bf16.mxu0 0
    %612 = vmatpush1.bf16.msra.mxu0 0
    %613 = vmatprep.mubr.bf16.mxu0 0
    %614 = vmatmul.mubr.bf16.gmra.mrb[0].mxu0 %v502
    %v615 = vpop.f32.mrb[0].mxu0
    %v616 = vadd.f32 %v531, %v615
    %v617 = vpop.f32.mrb[0].mxu0
    %v618 = vpop.f32.mrb[0].mxu0
    %v619 = vadd.f32 %v531, %v618
    %v620 = vpop.f32.mrb[0].mxu0
    %621 = vmatprep.mubr.bf16.mxu0 0
    %622 = vmatmul.mubr.bf16.gmra.mrb[0].mxu0 %v503
    %v623 = vpop.f32.mrb[0].mxu0
    %v624 = vadd.f32 %v531, %v623
    %v625 = vpop.f32.mrb[0].mxu0
    %v626 = vpop.f32.mrb[0].mxu0
    %v627 = vadd.f32 %v531, %v626
    %v628 = vpop.f32.mrb[0].mxu0
    %629 = vmatprep.mubr.bf16.mxu0 0
    %630 = vmatmul.mubr.bf16.gmra.mrb[0].mxu0 %v504
    %v631 = vpop.f32.mrb[0].mxu0
    %v632 = vadd.f32 %v531, %v631
    %v633 = vpop.f32.mrb[0].mxu0
    %v634 = vpop.f32.mrb[0].mxu0
    %v635 = vadd.f32 %v531, %v634
    %v636 = vpop.f32.mrb[0].mxu0
    %637 = vmatprep.mubr.bf16.mxu0 0
    %638 = vmatmul.mubr.bf16.gmra.mrb[0].mxu0 %v505
    %v639 = vpop.f32.mrb[0].mxu0
    %v640 = vadd.f32 %v531, %v639
    %v641 = vpop.f32.mrb[0].mxu0
    %v642 = vpop.f32.mrb[0].mxu0
    %v643 = vadd.f32 %v531, %v642
    %v644 = vpop.f32.mrb[0].mxu0
    %645 = vmatprep.mubr.bf16.mxu0 0
    %646 = vmatmul.mubr.bf16.gmra.mrb[0].mxu0 %v506
    %v647 = vpop.f32.mrb[0].mxu0
    %v648 = vadd.f32 %v531, %v647
    %v649 = vpop.f32.mrb[0].mxu0
    %v650 = vpop.f32.mrb[0].mxu0
    %v651 = vadd.f32 %v531, %v650
    %v652 = vpop.f32.mrb[0].mxu0
    %653 = vmatprep.mubr.bf16.mxu0 0
    %654 = vmatmul.mubr.bf16.gmra.mrb[0].mxu0 %v507
    %v655 = vpop.f32.mrb[0].mxu0
    %v656 = vadd.f32 %v531, %v655
    %v657 = vpop.f32.mrb[0].mxu0
    %v658 = vpop.f32.mrb[0].mxu0
    %v659 = vadd.f32 %v531, %v658
    %v660 = vpop.f32.mrb[0].mxu0
    %661 = vmatprep.mubr.bf16.mxu0 0
    %662 = vmatmul.mubr.bf16.gmra.mrb[0].mxu0 %v508
    %v663 = vpop.f32.mrb[0].mxu0
    %v664 = vadd.f32 %v531, %v663
    %v665 = vpop.f32.mrb[0].mxu0
    %v666 = vpop.f32.mrb[0].mxu0
    %v667 = vadd.f32 %v531, %v666
    %v668 = vpop.f32.mrb[0].mxu0
    %669 = vmatprep.mubr.bf16.mxu0 0
    %670 = vmatmul.mubr.bf16.gmra.mrb[0].mxu0 %v509
    %v671 = vpop.f32.mrb[0].mxu0
    %v672 = vadd.f32 %v531, %v671
    %v673 = vpop.f32.mrb[0].mxu0
    %v674 = vpop.f32.mrb[0].mxu0
    %v675 = vadd.f32 %v531, %v674
    %v676 = vpop.f32.mrb[0].mxu0
    %677 = vdwg.mxu0
    %v678 = vmax.f32 %v616, 0.0
    %v679 = vmax.f32 %v619, 0.0
    %v680 = vmax.f32 %v624, 0.0
    %v681 = vmax.f32 %v627, 0.0
    %v682 = vmax.f32 %v632, 0.0
    %v683 = vmax.f32 %v635, 0.0
    %v684 = vmax.f32 %v640, 0.0
    %v685 = vmax.f32 %v643, 0.0
    %v686 = vmax.f32 %v648, 0.0
    %v687 = vmax.f32 %v651, 0.0
    %v688 = vmax.f32 %v656, 0.0
    %v689 = vmax.f32 %v659, 0.0
    %v690 = vmax.f32 %v664, 0.0
    %v691 = vmax.f32 %v667, 0.0
    %v692 = vmax.f32 %v672, 0.0
    %v693 = vmax.f32 %v675, 0.0
    %v694 = vld [vmem:[%s5] sm:$0x1]
    %v695 = vpack.c.bf16 %v679, %v678
    %v696 = vpack.c.bf16 %v681, %v680
    %v697 = vpack.c.bf16 %v683, %v682
    %v698 = vpack.c.bf16 %v685, %v684
    %v699 = vpack.c.bf16 %v687, %v686
    %v700 = vpack.c.bf16 %v689, %v688
    %v701 = vpack.c.bf16 %v691, %v690
    %v702 = vpack.c.bf16 %v693, %v692
    %v703 = vld [vmem:[%s6] sm:$0x3]
    %705 = vset.pattern.permute.xlu0 0
    %706 = vperm.xlu0 %705, %v703
    %v707 = vpop.permute.xlu0 %706
    %709 = vmatprep.subr.bf16.mxu0 0
    %710 = vmatpush1.bf16.xpose.msra.mxu0 %v695
    %711 = vmatprep.subr.bf16.mxu0 0
    %712 = vmatpush1.bf16.xpose.msra.mxu0 %v696
    %713 = vmatprep.subr.bf16.mxu0 0
    %714 = vmatpush1.bf16.xpose.msra.mxu0 %v697
    %715 = vmatprep.subr.bf16.mxu0 0
    %716 = vmatpush1.bf16.xpose.msra.mxu0 %v698
    %717 = vmatprep.subr.bf16.mxu0 0
    %718 = vmatpush1.bf16.xpose.msra.mxu0 %v699
    %719 = vmatprep.subr.bf16.mxu0 0
    %720 = vmatpush1.bf16.xpose.msra.mxu0 %v700
    %721 = vmatprep.subr.bf16.mxu0 0
    %722 = vmatpush1.bf16.xpose.msra.mxu0 %v701
    %723 = vmatprep.subr.bf16.mxu0 0
    %724 = vmatpush1.bf16.xpose.msra.mxu0 %v702
    %725 = vmatprep.subr.bf16.mxu0 0
    %726 = vmatpush1.bf16.xpose.msra.mxu0 0
    %727 = vmatprep.subr.bf16.mxu0 0
    %728 = vmatpush1.bf16.xpose.msra.mxu0 0
    %729 = vmatprep.subr.bf16.mxu0 0
    %730 = vmatpush1.bf16.xpose.msra.mxu0 0
    %731 = vmatprep.subr.bf16.mxu0 0
    %732 = vmatpush1.bf16.xpose.msra.mxu0 0
    %733 = vmatprep.subr.bf16.mxu0 0
    %734 = vmatpush1.bf16.xpose.msra.mxu0 0
    %735 = vmatprep.subr.bf16.mxu0 0
    %736 = vmatpush1.bf16.xpose.msra.mxu0 0
    %737 = vmatprep.subr.bf16.mxu0 0
    %738 = vmatpush1.bf16.xpose.msra.mxu0 0
    %739 = vmatprep.subr.bf16.mxu0 0
    %740 = vmatpush1.bf16.xpose.msra.mxu0 0
    %741 = vmatprep.mubr.bf16.mxu0 0
    %742 = vmatmul.mubr.bf16.gmra.mrb[0].mxu0 %v694
    %v743 = vpop.f32.mrb[0].mxu0
    %v744 = vadd.f32 %v707, %v743
    %v745 = vpop.f32.mrb[0].mxu0
    %v746 = vpop.f32.mrb[0].mxu0
    %v747 = vpop.f32.mrb[0].mxu0
    %748 = vdwg.mxu0
    %v749 = vmax.f32 %v744, 0.0
    %v750 = vand.u32 2147483647, %v744
    %v751 = vsub.f32 0.0, %v750
    %v752 = vmul.f32 %v751, 1.442695
    %v753 = vpow.pop %v752
    %v754 = vadd.f32 %v753, 1.0
    %v755 = vlog2.pop %v754
    %v756 = vmul.f32 %v755, 0.6931472
    %v757 = vadd.f32 %v749, %v756
    %v758 = vadd.f32 %v757, 1e-06
    %v759 = vlaneseq
    %v760 = vshrl.u32 %v759, 7
    %vm761 = vcmp.eq.s32.totalorder %v760, 1
    %v762 = vsel %vm761, %v758, %v744
    %763 = vst [vmem:[#allocation2] sm:$0x3] %v762
    // Predicated region
    $region30: #{tpu_custom_call.1} parent=1 // pred_check
      _
    $region31: #{tpu_custom_call.1} parent=1 // pred_check_branch
      %765 = sbr.rel (0) target = $region33
    $region32: #{tpu_custom_call.1} parent=1 // pred_region
      %s767 = ssub.s32 32, 32
      %768 = vsyncadd [#allocation3], %s767
      %s770 = sshll.u32 [#allocation2], 4
      %s771 = int_to_ptr.vmem [resolvable:$true] %s770
      %773 = dma.vmem_to_hbm [thread:$0]  %s771, 32, %s7, [#allocation3]
    $region33: #{tpu_custom_call.1} parent=1 // pred_fallthru
      _
    // Predicated region
    $region34: #{tpu_custom_call.1} parent=1 // pred_check
      _
    $region35: #{tpu_custom_call.1} parent=1 // pred_check_branch
      %775 = sbr.rel (0) target = $region37
    $region36: #{tpu_custom_call.1} parent=1 // pred_region
      %776 = dma.done [#allocation3], 32
    $region37: #{tpu_custom_call.1} parent=1 // pred_fallthru
      _
    %777 = vsyncpa [#allocation3], 1

</llo_original>
